<compile_context>
chip_gen: v7x
topology: tpu7x:2x2x1
jax: 0.10.0
libtpu: 0.0.40
codegen_flags: <defaults>
</compile_context>

<pallas_src>
import functools

import jax
import jax.numpy as jnp
from jax.experimental import pallas as pl
from jax.experimental.pallas import tpu as pltpu


def gru_mp_kernel(bg_ref, x_ref, wpack_ref, bpack_ref, wzh_ref, ur_ref, whh_ref,
                  out_ref, *, depth: int, max_nei: int, mm_dtype):
    f32 = jnp.float32
    Np, Hp = out_ref.shape

    # ---------------- hoisted, depth-invariant prologue (runs once) ----------------
    # One fused x-side projection: [x@W_z_x | x@W_r | x@W_h_x] + [b_z | b_ur | b_h].
    xproj = jnp.dot(x_ref[...], wpack_ref[...],
                    preferred_element_type=f32) + bpack_ref[...]
    xz = xproj[:, 0 * Hp:1 * Hp]        # W_z x-part + b_z
    r1b = xproj[:, 1 * Hp:2 * Hp]       # W_r(x)     + b_ur  (U_r bias folded here)
    xh = xproj[:, 2 * Hp:3 * Hp]        # W_h x-part + b_h

    # Stacked one-hot gather matrix (all neighbor slots), built once, in the
    # MXU-native matmul dtype (bf16 on the fast path).  Rows [j*Np,(j+1)*Np)
    # correspond to neighbor slot j (bg_ref is bgraph laid out column-major).
    bg = bg_ref[...]                                               # (max_nei*Np, 1)
    col = jax.lax.broadcasted_iota(jnp.int32, (max_nei * Np, Np), 1)
    onehot = (bg == col).astype(mm_dtype)                          # (max_nei*Np, Np)

    # Row 0 is the padding message: masked to zero every step (as in PyTorch).
    # Broadcast hoisted out of the depth loop (built once as a full slab).
    mask_b = jnp.broadcast_to(
        (jax.lax.broadcasted_iota(jnp.int32, (Np, 1), 0) != 0).astype(f32),
        (Np, Hp))

    wzh = wzh_ref[...]
    ur = ur_ref[...]
    whh = whh_ref[...]

    # ---------------- depth loop: fori_loop with h as the carry ----------------
    def depth_step(_, h):
        # Single shadow cast of h per depth step (identity on the f32 path).
        h16 = h.astype(mm_dtype)
        # All-slot gather h[bgraph] in ONE matmul (exact row selection).
        hn = jnp.dot(onehot, h16, preferred_element_type=f32)      # (max_nei*Np, Hp)
        # Single batched U_r matmul over all neighbor slots (fills MXU M-dim).
        # hn holds exact mm_dtype values, so the cast below is exact.
        r2 = jnp.dot(hn.astype(mm_dtype), ur,
                     preferred_element_type=f32)                   # (max_nei*Np, Hp)

        # Cheap VPU per-slot reduction (static sublane-block slices, Np % 8 == 0).
        sum_h = jnp.zeros((Np, Hp), f32)
        sum_gated = jnp.zeros((Np, Hp), f32)
        for j in range(max_nei):
            h_j = hn[j * Np:(j + 1) * Np, :]
            r_j = jax.nn.sigmoid(r1b + r2[j * Np:(j + 1) * Np, :])
            sum_h = sum_h + h_j
            sum_gated = sum_gated + r_j * h_j

        z = jax.nn.sigmoid(
            xz + jnp.dot(sum_h.astype(mm_dtype), wzh, preferred_element_type=f32))
        pre_h = jnp.tanh(
            xh + jnp.dot(sum_gated.astype(mm_dtype), whh, preferred_element_type=f32))
        # TODO(synk): inter-step nn.Dropout is identity in eval mode; not applied.
        return ((1.0 - z) * sum_h + z * pre_h) * mask_b

    h = jax.lax.fori_loop(0, depth, depth_step, jnp.zeros((Np, Hp), f32))
    out_ref[...] = h


def _pad2(a, rows, cols):
    return jnp.zeros((rows, cols), a.dtype).at[:a.shape[0], :a.shape[1]].set(a)


def _vmem_budget_bytes():
    """Per-generation VMEM budget (review: do not hard-code 32 MiB)."""
    cap = 64 * 1024 * 1024                      # conservative default (v7x physical)
    try:
        cap = int(pltpu.get_tpu_info().vmem_capacity_bytes)
    except Exception:
        pass                                    # interpret/CPU/older jax: keep default
    return min((cap * 3) // 4, 100 * 1024 * 1024)


def gru_forward(fmess, bgraph, params, *, depth, param_dtype=jnp.bfloat16):
    """GRU.forward.  param_dtype=bf16 runs MXU at native rate with f32
    accumulation (recurrence and gate math stay f32); pass jnp.float32 for a
    bit-faithful f32 validation path."""
    N, in_size = fmess.shape
    _, max_nei = bgraph.shape
    H = params["W_z_h"].shape[1]

    # Padded h rows (index >= N) must never be gather targets; out-of-range
    # indices would silently read garbage (review correctness concern).
    try:
        bmin, bmax = int(jnp.min(bgraph)), int(jnp.max(bgraph))
        assert 0 <= bmin and bmax < N, "bgraph indices must lie in [0, N)"
    except jax.errors.ConcretizationTypeError:
        pass                                    # traced input: skip host-side check

    Hp = max(128, ((H + 127) // 128) * 128)     # lane-dense hidden width
    Np = ((N + 7) // 8) * 8                     # sublane-aligned message count

    # Pack the three x-side projections (+ their biases) into one (in, 3*Hp) GEMM.
    wpack = jnp.concatenate(
        [_pad2(params["W_z_x"], in_size, Hp),
         _pad2(params["W_r"], in_size, Hp),
         _pad2(params["W_h_x"], in_size, Hp)], axis=1).astype(param_dtype)
    bpack = jnp.concatenate(
        [_pad2(params["b_z"], 1, Hp),
         _pad2(params["b_ur"], 1, Hp),
         _pad2(params["b_h"], 1, Hp)], axis=1).astype(jnp.float32)

    wzh = _pad2(params["W_z_h"], Hp, Hp).astype(param_dtype)
    ur = _pad2(params["U_r"], Hp, Hp).astype(param_dtype)
    whh = _pad2(params["W_h_h"], Hp, Hp).astype(param_dtype)

    x = _pad2(fmess.astype(jnp.float32), Np, in_size).astype(param_dtype)

    # bgraph: padded rows point at the (masked) padding message 0, laid out
    # column-major so each neighbor slot is a contiguous sublane block.
    bg = jnp.zeros((Np, max_nei), jnp.int32).at[:N].set(bgraph.astype(jnp.int32))
    bg_cm = bg.T.reshape(max_nei * Np, 1)

    kernel = functools.partial(gru_mp_kernel, depth=depth, max_nei=max_nei,
                               mm_dtype=param_dtype)
    vmem = pl.BlockSpec(memory_space=pltpu.MemorySpace.VMEM)
    out = pl.pallas_call(
        kernel,
        out_shape=jax.ShapeDtypeStruct((Np, Hp), jnp.float32),
        in_specs=[vmem] * 7,
        out_specs=vmem,
        compiler_params=pltpu.CompilerParams(vmem_limit_bytes=_vmem_budget_bytes()),
    )(bg_cm, x, wpack, bpack, wzh, ur, whh)
    return out[:N, :H]


def init_params(key, input_size, h_size):
    """Deterministic PyTorch-Linear-style init (uniform +-1/sqrt(fan_in)).

    W_z / W_h take the concatenated [x, sum_h] input; stored pre-split as
    (input_size, h) and (h, h) blocks, transposed relative to torch (x @ W).
    """
    ks = jax.random.split(key, 9)

    def u(k, shape, fan_in):
        b = 1.0 / jnp.sqrt(float(fan_in))
        return jax.random.uniform(k, shape, jnp.float32, -b, b)

    fz = input_size + h_size
    return {
        "W_z_x": u(ks[0], (input_size, h_size), fz),
        "W_z_h": u(ks[1], (h_size, h_size), fz),
        "b_z":   u(ks[2], (1, h_size), fz),
        "W_r":   u(ks[3], (input_size, h_size), input_size),
        "U_r":   u(ks[4], (h_size, h_size), h_size),
        "b_ur":  u(ks[5], (1, h_size), h_size),
        "W_h_x": u(ks[6], (input_size, h_size), fz),
        "W_h_h": u(ks[7], (h_size, h_size), fz),
        "b_h":   u(ks[8], (1, h_size), fz),
    }


def gru_forward_ref(fmess, bgraph, params, *, depth):
    """Pure-JAX f32 reference mirroring the PyTorch forward (eval mode)."""
    N = fmess.shape[0]
    H = params["W_z_h"].shape[1]
    h = jnp.zeros((N, H), jnp.float32)
    mask = jnp.ones((N, 1), jnp.float32).at[0, 0].set(0.0)
    for _ in range(depth):
        h_nei = h[bgraph]                                  # (N, max_nei, H)
        sum_h = h_nei.sum(axis=1)
        z = jax.nn.sigmoid(fmess @ params["W_z_x"] + sum_h @ params["W_z_h"]
                           + params["b_z"])
        r1 = (fmess @ params["W_r"])[:, None, :]
        r2 = h_nei @ params["U_r"] + params["b_ur"]
        r = jax.nn.sigmoid(r1 + r2)
        sum_gated = (r * h_nei).sum(axis=1)
        pre_h = jnp.tanh(fmess @ params["W_h_x"] + sum_gated @ params["W_h_h"]
                         + params["b_h"])
        h = (1.0 - z) * sum_h + z * pre_h
        h = h * mask
    return h


if __name__ == "__main__":
    N = 16          # number of messages (directed bonds)
    INPUT_SIZE = 16
    H_SIZE = 32
    MAX_NEI = 4
    DEPTH = 3

    key = jax.random.PRNGKey(0)
    k_f, k_b, k_p = jax.random.split(key, 3)

    fmess = jax.random.normal(k_f, (N, INPUT_SIZE), jnp.float32)
    bgraph = jax.random.randint(k_b, (N, MAX_NEI), 0, N, jnp.int32)
    params = init_params(k_p, INPUT_SIZE, H_SIZE)

    ref = gru_forward_ref(fmess, bgraph, params, depth=DEPTH)

    # f32 path: validates the kernel math against the pure-JAX reference.
    out_f32 = jax.block_until_ready(
        gru_forward(fmess, bgraph, params, depth=DEPTH, param_dtype=jnp.float32))
    assert out_f32.shape == (N, H_SIZE)
    assert jnp.allclose(out_f32, ref, atol=1e-5, rtol=1e-5), "f32 mismatch vs ref"

    # bf16-weight fast path: bf16 MXU operands (gather / U_r / gate matmuls),
    # f32 accumulation and f32 h recurrence — small, bounded rounding vs f32 ref.
    out_bf16 = jax.block_until_ready(
        gru_forward(fmess, bgraph, params, depth=DEPTH, param_dtype=jnp.bfloat16))
    assert out_bf16.shape == (N, H_SIZE)
    assert jnp.allclose(out_bf16, ref, atol=3e-2, rtol=3e-2), "bf16 mismatch vs ref"

    print("KERNEL_OK")
</pallas_src>

<mosaic_0001>
module attributes {stable_mosaic.version = 11 : i64} {
  func.func @gru_mp_kernel(%arg0: memref<64x1xi32, #tpu.memory_space<vmem>>, %arg1: memref<16x16xf32, #tpu.memory_space<vmem>>, %arg2: memref<16x384xf32, #tpu.memory_space<vmem>>, %arg3: memref<1x384xf32, #tpu.memory_space<vmem>>, %arg4: memref<128x128xf32, #tpu.memory_space<vmem>>, %arg5: memref<128x128xf32, #tpu.memory_space<vmem>>, %arg6: memref<128x128xf32, #tpu.memory_space<vmem>>, %arg7: memref<16x128xf32, #tpu.memory_space<vmem>>) attributes {dimension_semantics = [], scalar_prefetch = 0 : i64, scratch_operands = 0 : i64, tpu.core_type = #tpu.core_type<tc>} {
    %c0 = arith.constant 0 : index
    %c0_0 = arith.constant 0 : index
    %0 = vector.load %arg1[%c0, %c0_0] : memref<16x16xf32, #tpu.memory_space<vmem>>, vector<16x16xf32>
    %c0_1 = arith.constant 0 : index
    %c0_2 = arith.constant 0 : index
    %1 = vector.load %arg2[%c0_1, %c0_2] : memref<16x384xf32, #tpu.memory_space<vmem>>, vector<16x384xf32>
    %cst = arith.constant dense<0.000000e+00> : vector<16x384xf32>
    %2 = tpu.matmul %0, %1, %cst {dimension_numbers = #tpu.dot_dimension_numbers<[1], [0], [0], [1], [0, 0, 1, 1], [], []>} : vector<16x16xf32>, vector<16x384xf32>, vector<16x384xf32> -> vector<16x384xf32>
    %c0_3 = arith.constant 0 : index
    %c0_4 = arith.constant 0 : index
    %3 = vector.load %arg3[%c0_3, %c0_4] : memref<1x384xf32, #tpu.memory_space<vmem>>, vector<1x384xf32>
    %4 = vector.broadcast %3 : vector<1x384xf32> to vector<16x384xf32>
    %5 = arith.addf %2, %4 : vector<16x384xf32>
    %6 = vector.extract_strided_slice %5 {offsets = [0, 0], sizes = [16, 128], strides = [1, 1]} : vector<16x384xf32> to vector<16x128xf32>
    %7 = vector.extract_strided_slice %5 {offsets = [0, 128], sizes = [16, 128], strides = [1, 1]} : vector<16x384xf32> to vector<16x128xf32>
    %8 = vector.extract_strided_slice %5 {offsets = [0, 256], sizes = [16, 128], strides = [1, 1]} : vector<16x384xf32> to vector<16x128xf32>
    %c0_5 = arith.constant 0 : index
    %c0_6 = arith.constant 0 : index
    %9 = vector.load %arg0[%c0_5, %c0_6] : memref<64x1xi32, #tpu.memory_space<vmem>>, vector<64x1xi32>
    %10 = tpu.iota {dimensions = array<i32: 1>} : vector<64x16xi32>
    %11 = vector.broadcast %9 : vector<64x1xi32> to vector<64x16xi32>
    %12 = arith.cmpi eq, %11, %10 : vector<64x16xi32>
    %13 = arith.extui %12 : vector<64x16xi1> to vector<64x16xi32>
    %14 = arith.sitofp %13 : vector<64x16xi32> to vector<64x16xf32>
    %15 = tpu.iota {dimensions = array<i32: 0>} : vector<16x1xi32>
    %c0_i32 = arith.constant 0 : i32
    %16 = vector.broadcast %c0_i32 : i32 to vector<16x1xi32>
    %17 = arith.cmpi ne, %15, %16 : vector<16x1xi32>
    %18 = arith.extui %17 : vector<16x1xi1> to vector<16x1xi32>
    %19 = arith.sitofp %18 : vector<16x1xi32> to vector<16x1xf32>
    %20 = vector.shape_cast %19 : vector<16x1xf32> to vector<16x1xf32>
    %21 = vector.broadcast %20 : vector<16x1xf32> to vector<16x128xf32>
    %c0_7 = arith.constant 0 : index
    %c0_8 = arith.constant 0 : index
    %22 = vector.load %arg4[%c0_7, %c0_8] : memref<128x128xf32, #tpu.memory_space<vmem>>, vector<128x128xf32>
    %c0_9 = arith.constant 0 : index
    %c0_10 = arith.constant 0 : index
    %23 = vector.load %arg5[%c0_9, %c0_10] : memref<128x128xf32, #tpu.memory_space<vmem>>, vector<128x128xf32>
    %c0_11 = arith.constant 0 : index
    %c0_12 = arith.constant 0 : index
    %24 = vector.load %arg6[%c0_11, %c0_12] : memref<128x128xf32, #tpu.memory_space<vmem>>, vector<128x128xf32>
    %cst_13 = arith.constant 0.000000e+00 : f32
    %25 = vector.broadcast %cst_13 : f32 to vector<16x128xf32>
    %c0_i32_14 = arith.constant 0 : i32
    %c3_i32 = arith.constant 3 : i32
    %26 = arith.addi %c0_i32_14, %c3_i32 : i32
    %c1_i32 = arith.constant 1 : i32
    %27 = scf.for %arg8 = %c0_i32_14 to %26 step %c1_i32 iter_args(%arg9 = %25) -> (vector<16x128xf32>)  : i32 {
      %cst_17 = arith.constant dense<0.000000e+00> : vector<64x128xf32>
      %29 = tpu.matmul %14, %arg9, %cst_17 {dimension_numbers = #tpu.dot_dimension_numbers<[1], [0], [0], [1], [0, 0, 1, 1], [], []>} : vector<64x16xf32>, vector<16x128xf32>, vector<64x128xf32> -> vector<64x128xf32>
      %cst_18 = arith.constant dense<0.000000e+00> : vector<64x128xf32>
      %30 = tpu.matmul %29, %23, %cst_18 {dimension_numbers = #tpu.dot_dimension_numbers<[1], [0], [0], [1], [0, 0, 1, 1], [], []>} : vector<64x128xf32>, vector<128x128xf32>, vector<64x128xf32> -> vector<64x128xf32>
      %cst_19 = arith.constant 0.000000e+00 : f32
      %31 = vector.broadcast %cst_19 : f32 to vector<16x128xf32>
      %cst_20 = arith.constant 0.000000e+00 : f32
      %32 = vector.broadcast %cst_20 : f32 to vector<16x128xf32>
      %33 = vector.extract_strided_slice %29 {offsets = [0, 0], sizes = [16, 128], strides = [1, 1]} : vector<64x128xf32> to vector<16x128xf32>
      %34 = vector.extract_strided_slice %30 {offsets = [0, 0], sizes = [16, 128], strides = [1, 1]} : vector<64x128xf32> to vector<16x128xf32>
      %35 = arith.addf %7, %34 : vector<16x128xf32>
      %36 = arith.negf %35 : vector<16x128xf32>
      %37 = math.exp %36 : vector<16x128xf32>
      %cst_21 = arith.constant 1.000000e+00 : f32
      %38 = vector.broadcast %cst_21 : f32 to vector<16x128xf32>
      %39 = arith.addf %38, %37 : vector<16x128xf32>
      %40 = arith.divf %38, %39 : vector<16x128xf32>
      %41 = arith.addf %31, %33 : vector<16x128xf32>
      %42 = arith.mulf %40, %33 : vector<16x128xf32>
      %43 = arith.addf %32, %42 : vector<16x128xf32>
      %44 = vector.extract_strided_slice %29 {offsets = [16, 0], sizes = [16, 128], strides = [1, 1]} : vector<64x128xf32> to vector<16x128xf32>
      %45 = vector.extract_strided_slice %30 {offsets = [16, 0], sizes = [16, 128], strides = [1, 1]} : vector<64x128xf32> to vector<16x128xf32>
      %46 = arith.addf %7, %45 : vector<16x128xf32>
      %47 = arith.negf %46 : vector<16x128xf32>
      %48 = math.exp %47 : vector<16x128xf32>
      %cst_22 = arith.constant 1.000000e+00 : f32
      %49 = vector.broadcast %cst_22 : f32 to vector<16x128xf32>
      %50 = arith.addf %49, %48 : vector<16x128xf32>
      %51 = arith.divf %49, %50 : vector<16x128xf32>
      %52 = arith.addf %41, %44 : vector<16x128xf32>
      %53 = arith.mulf %51, %44 : vector<16x128xf32>
      %54 = arith.addf %43, %53 : vector<16x128xf32>
      %55 = vector.extract_strided_slice %29 {offsets = [32, 0], sizes = [16, 128], strides = [1, 1]} : vector<64x128xf32> to vector<16x128xf32>
      %56 = vector.extract_strided_slice %30 {offsets = [32, 0], sizes = [16, 128], strides = [1, 1]} : vector<64x128xf32> to vector<16x128xf32>
      %57 = arith.addf %7, %56 : vector<16x128xf32>
      %58 = arith.negf %57 : vector<16x128xf32>
      %59 = math.exp %58 : vector<16x128xf32>
      %cst_23 = arith.constant 1.000000e+00 : f32
      %60 = vector.broadcast %cst_23 : f32 to vector<16x128xf32>
      %61 = arith.addf %60, %59 : vector<16x128xf32>
      %62 = arith.divf %60, %61 : vector<16x128xf32>
      %63 = arith.addf %52, %55 : vector<16x128xf32>
      %64 = arith.mulf %62, %55 : vector<16x128xf32>
      %65 = arith.addf %54, %64 : vector<16x128xf32>
      %66 = vector.extract_strided_slice %29 {offsets = [48, 0], sizes = [16, 128], strides = [1, 1]} : vector<64x128xf32> to vector<16x128xf32>
      %67 = vector.extract_strided_slice %30 {offsets = [48, 0], sizes = [16, 128], strides = [1, 1]} : vector<64x128xf32> to vector<16x128xf32>
      %68 = arith.addf %7, %67 : vector<16x128xf32>
      %69 = arith.negf %68 : vector<16x128xf32>
      %70 = math.exp %69 : vector<16x128xf32>
      %cst_24 = arith.constant 1.000000e+00 : f32
      %71 = vector.broadcast %cst_24 : f32 to vector<16x128xf32>
      %72 = arith.addf %71, %70 : vector<16x128xf32>
      %73 = arith.divf %71, %72 : vector<16x128xf32>
      %74 = arith.addf %63, %66 : vector<16x128xf32>
      %75 = arith.mulf %73, %66 : vector<16x128xf32>
      %76 = arith.addf %65, %75 : vector<16x128xf32>
      %cst_25 = arith.constant dense<0.000000e+00> : vector<16x128xf32>
      %77 = tpu.matmul %74, %22, %cst_25 {dimension_numbers = #tpu.dot_dimension_numbers<[1], [0], [0], [1], [0, 0, 1, 1], [], []>} : vector<16x128xf32>, vector<128x128xf32>, vector<16x128xf32> -> vector<16x128xf32>
      %78 = arith.addf %6, %77 : vector<16x128xf32>
      %79 = arith.negf %78 : vector<16x128xf32>
      %80 = math.exp %79 : vector<16x128xf32>
      %cst_26 = arith.constant 1.000000e+00 : f32
      %81 = vector.broadcast %cst_26 : f32 to vector<16x128xf32>
      %82 = arith.addf %81, %80 : vector<16x128xf32>
      %83 = arith.divf %81, %82 : vector<16x128xf32>
      %cst_27 = arith.constant dense<0.000000e+00> : vector<16x128xf32>
      %84 = tpu.matmul %76, %24, %cst_27 {dimension_numbers = #tpu.dot_dimension_numbers<[1], [0], [0], [1], [0, 0, 1, 1], [], []>} : vector<16x128xf32>, vector<128x128xf32>, vector<16x128xf32> -> vector<16x128xf32>
      %85 = arith.addf %8, %84 : vector<16x128xf32>
      %86 = math.tanh %85 : vector<16x128xf32>
      %cst_28 = arith.constant 1.000000e+00 : f32
      %87 = vector.broadcast %cst_28 : f32 to vector<16x128xf32>
      %88 = arith.subf %87, %83 : vector<16x128xf32>
      %89 = arith.mulf %88, %74 : vector<16x128xf32>
      %90 = arith.mulf %83, %86 : vector<16x128xf32>
      %91 = arith.addf %89, %90 : vector<16x128xf32>
      %92 = arith.mulf %91, %21 : vector<16x128xf32>
      scf.yield %92 : vector<16x128xf32>
    }
    %c0_15 = arith.constant 0 : index
    %c0_16 = arith.constant 0 : index
    %28 = vector.load %arg7[%c0_15, %c0_16] : memref<16x128xf32, #tpu.memory_space<vmem>>, vector<16x128xf32>
    tpu.vector_store %arg7[%c0_15, %c0_16], %27 {strides = array<i32>} : memref<16x128xf32, #tpu.memory_space<vmem>>, vector<16x128xf32>,
    return
  }
}

</mosaic_0001>

<llo_original>
// kernel: tpu_custom_call.1
$region0: #{tpu_custom_call.1}
  #allocation0 [shape = 'u32[]', space=smem, size = 0x4, offset = 0x4, fixed_abs, tag = 'smem constant byte address 0x4 - core index']
  #allocation1 [shape = 'u32[144,128]{1,0:T(1,128)}', space=vmem, size = 0x12000, scoped, tag = 'internal scratch']
  %s0 = inlined_call_operand.vmem [shape: s32[64,1], index: 0, kind: input, shape index: {}]
  %s1 = inlined_call_operand.vmem [shape: f32[16,16], index: 1, kind: input, shape index: {}]
  %s2 = inlined_call_operand.vmem [shape: f32[16,384], index: 2, kind: input, shape index: {}]
  %s3 = inlined_call_operand.vmem [shape: f32[1,384], index: 3, kind: input, shape index: {}]
  %s4 = inlined_call_operand.hbm [shape: f32[128,128], index: 4, kind: input, shape index: {}]
  %s5 = inlined_call_operand.hbm [shape: f32[128,128], index: 5, kind: input, shape index: {}]
  %s6 = inlined_call_operand.hbm [shape: f32[128,128], index: 6, kind: input, shape index: {}]
  %s7 = inlined_call_operand.hbm [shape: f32[16,128], index: 7, kind: output, shape index: {}]
  %s8 = sld [smem:[#allocation0]]
  $region57: #{tpu_custom_call.1} parent=0
    _
  %s10 = ssub.s32 1, %s8
  %s11 = scalar_select 0, %s10, %s8
  $region1: #{tpu_custom_call.1} parent=0
    #allocation2 [shape = 'u8[65536]{0}', space=vmem, size = 0x10000, scoped, tag = 'input window, operand 4, single buffered']
    #allocation3 [shape = 's32[1]{0}', space=sflag, size = 0x4, scoped, tag = 'scoped memory for tpu_custom_call.1']
    #allocation4 [shape = 's32[1]{0}', space=sflag, size = 0x4, scoped, tag = 'scoped memory for tpu_custom_call.1']
    #allocation5 [shape = 'u8[65536]{0}', space=vmem, size = 0x10000, scoped, tag = 'input window, operand 5, single buffered']
    #allocation6 [shape = 's32[1]{0}', space=sflag, size = 0x4, scoped, tag = 'scoped memory for tpu_custom_call.1']
    #allocation7 [shape = 'u8[65536]{0}', space=vmem, size = 0x10000, scoped, tag = 'input window, operand 6, single buffered']
    #allocation8 [shape = 'u8[8192]{0}', space=vmem, size = 0x2000, scoped, tag = 'output window, operand 0, single buffered']
    %12 = vsyncpa [#allocation3], 0
    %13 = vsyncpa [#allocation6], 0
    %14 = vsyncpa [#allocation4], 0
    // Predicated region
    $region2: #{tpu_custom_call.1} parent=1 // pred_check
      _
    $region3: #{tpu_custom_call.1} parent=1 // pred_check_branch
      %16 = sbr.rel (0) target = $region5
    $region4: #{tpu_custom_call.1} parent=1 // pred_region
      _
    $region5: #{tpu_custom_call.1} parent=1 // pred_fallthru
      _
    // Predicated region
    $region6: #{tpu_custom_call.1} parent=1 // pred_check
      _
    $region7: #{tpu_custom_call.1} parent=1 // pred_check_branch
      %18 = sbr.rel (0) target = $region9
    $region8: #{tpu_custom_call.1} parent=1 // pred_region
      _
    $region9: #{tpu_custom_call.1} parent=1 // pred_fallthru
      _
    // Predicated region
    $region10: #{tpu_custom_call.1} parent=1 // pred_check
      _
    $region11: #{tpu_custom_call.1} parent=1 // pred_check_branch
      %20 = sbr.rel (0) target = $region13
    $region12: #{tpu_custom_call.1} parent=1 // pred_region
      _
    $region13: #{tpu_custom_call.1} parent=1 // pred_fallthru
      _
    // Predicated region
    $region14: #{tpu_custom_call.1} parent=1 // pred_check
      _
    $region15: #{tpu_custom_call.1} parent=1 // pred_check_branch
      %22 = sbr.rel (0) target = $region17
    $region16: #{tpu_custom_call.1} parent=1 // pred_region
      _
    $region17: #{tpu_custom_call.1} parent=1 // pred_fallthru
      _
    // Predicated region
    $region18: #{tpu_custom_call.1} parent=1 // pred_check
      _
    $region19: #{tpu_custom_call.1} parent=1 // pred_check_branch
      %24 = sbr.rel (0) target = $region21
    $region20: #{tpu_custom_call.1} parent=1 // pred_region
      %s26 = ssub.s32 2048, 2048
      %27 = vsyncadd [#allocation3], %s26
      %s28 = sshll.u32 [#allocation2], 4
      %s29 = int_to_ptr.vmem [resolvable:$true] %s28
      %34 = dma.hbm_to_vmem [thread:$0]  %s4, 2048, %s29, [#allocation3], 128, 128, 8
    $region21: #{tpu_custom_call.1} parent=1 // pred_fallthru
      _
    // Predicated region
    $region22: #{tpu_custom_call.1} parent=1 // pred_check
      _
    $region23: #{tpu_custom_call.1} parent=1 // pred_check_branch
      %36 = sbr.rel (0) target = $region25
    $region24: #{tpu_custom_call.1} parent=1 // pred_region
      %s38 = ssub.s32 2048, 2048
      %39 = vsyncadd [#allocation6], %s38
      %s40 = sshll.u32 [#allocation5], 4
      %s41 = int_to_ptr.vmem [resolvable:$true] %s40
      %46 = dma.hbm_to_vmem [thread:$0]  %s5, 2048, %s41, [#allocation6], 128, 128, 8
    $region25: #{tpu_custom_call.1} parent=1 // pred_fallthru
      _
    // Predicated region
    $region26: #{tpu_custom_call.1} parent=1 // pred_check
      _
    $region27: #{tpu_custom_call.1} parent=1 // pred_check_branch
      %48 = sbr.rel (0) target = $region29
    $region28: #{tpu_custom_call.1} parent=1 // pred_region
      %s50 = ssub.s32 2048, 2048
      %51 = vsyncadd [#allocation6], %s50
      %s52 = sshll.u32 [#allocation7], 4
      %s53 = int_to_ptr.vmem [resolvable:$true] %s52
      %58 = dma.hbm_to_vmem [thread:$0]  %s6, 2048, %s53, [#allocation6], 128, 128, 8
    $region29: #{tpu_custom_call.1} parent=1 // pred_fallthru
      _
    // Predicated region
    $region30: #{tpu_custom_call.1} parent=1 // pred_check
      _
    $region31: #{tpu_custom_call.1} parent=1 // pred_check_branch
      %60 = sbr.rel (0) target = $region33
    $region32: #{tpu_custom_call.1} parent=1 // pred_region
      %61 = dma.done [#allocation3], 2048
    $region33: #{tpu_custom_call.1} parent=1 // pred_fallthru
      _
    // Predicated region
    $region34: #{tpu_custom_call.1} parent=1 // pred_check
      _
    $region35: #{tpu_custom_call.1} parent=1 // pred_check_branch
      %63 = sbr.rel (0) target = $region37
    $region36: #{tpu_custom_call.1} parent=1 // pred_region
      %64 = dma.done [#allocation6], 2048
    $region37: #{tpu_custom_call.1} parent=1 // pred_fallthru
      _
    // Predicated region
    $region38: #{tpu_custom_call.1} parent=1 // pred_check
      _
    $region39: #{tpu_custom_call.1} parent=1 // pred_check_branch
      %66 = sbr.rel (0) target = $region41
    $region40: #{tpu_custom_call.1} parent=1 // pred_region
      %67 = dma.done [#allocation6], 2048
    $region41: #{tpu_custom_call.1} parent=1 // pred_fallthru
      _
    %v68 = vld [vmem:[%s1] sm:$0xff]
    %v69 = vld [vmem:[%s1 + $0x8] sm:$0xff]
    %v70 = vld [vmem:[%s2] sm:$0xff]
    %v71 = vld [vmem:[%s2 + $0x8] sm:$0xff]
    %v72 = vld [vmem:[%s2 + $0x10] sm:$0xff]
    %v73 = vld [vmem:[%s2 + $0x18] sm:$0xff]
    %v74 = vld [vmem:[%s2 + $0x20] sm:$0xff]
    %v75 = vld [vmem:[%s2 + $0x28] sm:$0xff]
    %v76 = vld [vmem:[%s3] sm:$0x7]
    %v78 = vlaneseq
    %v79 = vshrl.u32 %v78, 7
    %v80 = vsub.s32 0, %v79
    %v81 = vrot.slane %v76, %v80
    %v82 = vlaneseq
    %v83 = vshrl.u32 %v82, 7
    %v84 = vsub.s32 1, %v83
    %v85 = vrot.slane %v76, %v84
    %v86 = vlaneseq
    %v87 = vshrl.u32 %v86, 7
    %v88 = vsub.s32 2, %v87
    %v89 = vrot.slane %v76, %v88
    %vm93 = vcmask 130048
    %v95 = vsel %vm93, %v68, 0
    %v98 = vsel %vm93, %v69, 0
    %100 = vmatprep.subr.mxu0 %v71
    %101 = vmatpush1.msra.mxu0 %v70
    %102 = vmatprep.subr.mxu0 %v74
    %103 = vmatpush1.msra.mxu0 %v73
    %104 = vmatprep.subr.mxu0 0.0
    %105 = vmatpush1.msra.mxu0 0.0
    %106 = vmatprep.subr.mxu0 0.0
    %107 = vmatpush1.msra.mxu0 0.0
    %108 = vmatprep.subr.mxu0 0.0
    %109 = vmatpush1.msra.mxu0 0.0
    %110 = vmatprep.subr.mxu0 0.0
    %111 = vmatpush1.msra.mxu0 0.0
    %112 = vmatprep.subr.mxu0 0.0
    %113 = vmatpush1.msra.mxu0 0.0
    %114 = vmatprep.subr.mxu0 0.0
    %115 = vmatpush1.msra.mxu0 0.0
    %116 = vmatprep.subr.mxu0 0.0
    %117 = vmatpush1.msra.mxu0 0.0
    %118 = vmatprep.subr.mxu0 0.0
    %119 = vmatpush1.msra.mxu0 0.0
    %120 = vmatprep.subr.mxu0 0.0
    %121 = vmatpush1.msra.mxu0 0.0
    %122 = vmatprep.subr.mxu0 0.0
    %123 = vmatpush1.msra.mxu0 0.0
    %124 = vmatprep.subr.mxu0 0.0
    %125 = vmatpush1.msra.mxu0 0.0
    %126 = vmatprep.subr.mxu0 0.0
    %127 = vmatpush1.msra.mxu0 0.0
    %128 = vmatprep.subr.mxu0 0.0
    %129 = vmatpush1.msra.mxu0 0.0
    %130 = vmatprep.subr.mxu0 0.0
    %131 = vmatpush1.msra.mxu0 0.0
    %132 = vmatprep.subr.mxu0 0.0
    %133 = vmatpush1.msra.mxu0 0.0
    %134 = vmatprep.subr.mxu0 0.0
    %135 = vmatpush1.msra.mxu0 0.0
    %136 = vmatprep.subr.mxu0 0.0
    %137 = vmatpush1.msra.mxu0 0.0
    %138 = vmatprep.subr.mxu0 0.0
    %139 = vmatpush1.msra.mxu0 0.0
    %140 = vmatprep.subr.mxu0 0.0
    %141 = vmatpush1.msra.mxu0 0.0
    %142 = vmatprep.subr.mxu0 0.0
    %143 = vmatpush1.msra.mxu0 0.0
    %144 = vmatprep.subr.mxu0 0.0
    %145 = vmatpush1.msra.mxu0 0.0
    %146 = vmatprep.subr.mxu0 0.0
    %147 = vmatpush1.msra.mxu0 0.0
    %148 = vmatprep.subr.mxu0 0.0
    %149 = vmatpush1.msra.mxu0 0.0
    %150 = vmatprep.subr.mxu0 0.0
    %151 = vmatpush1.msra.mxu0 0.0
    %152 = vmatprep.subr.mxu0 0.0
    %153 = vmatpush1.msra.mxu0 0.0
    %154 = vmatprep.subr.mxu0 0.0
    %155 = vmatpush1.msra.mxu0 0.0
    %156 = vmatprep.subr.mxu0 0.0
    %157 = vmatpush1.msra.mxu0 0.0
    %158 = vmatprep.subr.mxu0 0.0
    %159 = vmatpush1.msra.mxu0 0.0
    %160 = vmatprep.subr.mxu0 0.0
    %161 = vmatpush1.msra.mxu0 0.0
    %162 = vmatprep.subr.mxu0 0.0
    %163 = vmatpush1.msra.mxu0 0.0
    %164 = vmatprep.mubr.f32.mxu0 0.0
    %165 = vmatmul.mubr.f32.gmra.mrb[0].mxu0 %v95
    %v166 = vpop.f32.mrb[0].mxu0
    %v167 = vadd.f32 %v81, %v166
    %v168 = vpop.f32.mrb[0].mxu0
    %v169 = vadd.f32 %v85, %v168
    %170 = vmatprep.mubr.f32.mxu0 0.0
    %171 = vmatmul.mubr.f32.gmra.mrb[0].mxu0 %v98
    %v172 = vpop.f32.mrb[0].mxu0
    %v173 = vadd.f32 %v81, %v172
    %v174 = vpop.f32.mrb[0].mxu0
    %v175 = vadd.f32 %v85, %v174
    %176 = vdwg.mxu0
    %177 = vmatprep.subr.mxu0 0.0
    %178 = vmatpush1.msra.mxu0 %v72
    %179 = vmatprep.subr.mxu0 0.0
    %180 = vmatpush1.msra.mxu0 %v75
    %181 = vmatprep.subr.mxu0 0.0
    %182 = vmatpush1.msra.mxu0 0.0
    %183 = vmatprep.subr.mxu0 0.0
    %184 = vmatpush1.msra.mxu0 0.0
    %185 = vmatprep.subr.mxu0 0.0
    %186 = vmatpush1.msra.mxu0 0.0
    %187 = vmatprep.subr.mxu0 0.0
    %188 = vmatpush1.msra.mxu0 0.0
    %189 = vmatprep.subr.mxu0 0.0
    %190 = vmatpush1.msra.mxu0 0.0
    %191 = vmatprep.subr.mxu0 0.0
    %192 = vmatpush1.msra.mxu0 0.0
    %193 = vmatprep.subr.mxu0 0.0
    %194 = vmatpush1.msra.mxu0 0.0
    %195 = vmatprep.subr.mxu0 0.0
    %196 = vmatpush1.msra.mxu0 0.0
    %197 = vmatprep.subr.mxu0 0.0
    %198 = vmatpush1.msra.mxu0 0.0
    %199 = vmatprep.subr.mxu0 0.0
    %200 = vmatpush1.msra.mxu0 0.0
    %201 = vmatprep.subr.mxu0 0.0
    %202 = vmatpush1.msra.mxu0 0.0
    %203 = vmatprep.subr.mxu0 0.0
    %204 = vmatpush1.msra.mxu0 0.0
    %205 = vmatprep.subr.mxu0 0.0
    %206 = vmatpush1.msra.mxu0 0.0
    %207 = vmatprep.subr.mxu0 0.0
    %208 = vmatpush1.msra.mxu0 0.0
    %209 = vmatprep.subr.mxu0 0.0
    %210 = vmatpush1.msra.mxu0 0.0
    %211 = vmatprep.subr.mxu0 0.0
    %212 = vmatpush1.msra.mxu0 0.0
    %213 = vmatprep.subr.mxu0 0.0
    %214 = vmatpush1.msra.mxu0 0.0
    %215 = vmatprep.subr.mxu0 0.0
    %216 = vmatpush1.msra.mxu0 0.0
    %217 = vmatprep.subr.mxu0 0.0
    %218 = vmatpush1.msra.mxu0 0.0
    %219 = vmatprep.subr.mxu0 0.0
    %220 = vmatpush1.msra.mxu0 0.0
    %221 = vmatprep.subr.mxu0 0.0
    %222 = vmatpush1.msra.mxu0 0.0
    %223 = vmatprep.subr.mxu0 0.0
    %224 = vmatpush1.msra.mxu0 0.0
    %225 = vmatprep.subr.mxu0 0.0
    %226 = vmatpush1.msra.mxu0 0.0
    %227 = vmatprep.subr.mxu0 0.0
    %228 = vmatpush1.msra.mxu0 0.0
    %229 = vmatprep.subr.mxu0 0.0
    %230 = vmatpush1.msra.mxu0 0.0
    %231 = vmatprep.subr.mxu0 0.0
    %232 = vmatpush1.msra.mxu0 0.0
    %233 = vmatprep.subr.mxu0 0.0
    %234 = vmatpush1.msra.mxu0 0.0
    %235 = vmatprep.subr.mxu0 0.0
    %236 = vmatpush1.msra.mxu0 0.0
    %237 = vmatprep.subr.mxu0 0.0
    %238 = vmatpush1.msra.mxu0 0.0
    %239 = vmatprep.subr.mxu0 0.0
    %240 = vmatpush1.msra.mxu0 0.0
    %241 = vmatprep.mubr.f32.mxu0 0.0
    %242 = vmatmul.mubr.f32.gmra.mrb[0].mxu0 %v95
    %v243 = vpop.f32.mrb[0].mxu0
    %v244 = vadd.f32 %v89, %v243
    %v245 = vpop.f32.mrb[0].mxu0
    %246 = vmatprep.mubr.f32.mxu0 0.0
    %247 = vmatmul.mubr.f32.gmra.mrb[0].mxu0 %v98
    %v248 = vpop.f32.mrb[0].mxu0
    %v249 = vadd.f32 %v89, %v248
    %v250 = vpop.f32.mrb[0].mxu0
    %251 = vdwg.mxu0
    %v252 = vld [vmem:[%s0] sm:$0xff]
    %v253 = vld [vmem:[%s0 + $0x8] sm:$0xff]
    %v254 = vld [vmem:[%s0 + $0x10] sm:$0xff]
    %v255 = vld [vmem:[%s0 + $0x18] sm:$0xff]
    %v256 = vld [vmem:[%s0 + $0x20] sm:$0xff]
    %v257 = vld [vmem:[%s0 + $0x28] sm:$0xff]
    %v258 = vld [vmem:[%s0 + $0x30] sm:$0xff]
    %v259 = vld [vmem:[%s0 + $0x38] sm:$0xff]
    %v260 = vlaneseq
    %v261 = vand.u32 %v260, 127
    %262 = vset.pattern.permute.xlu0 0
    %263 = vperm.xlu0 %262, %v252
    %v264 = vpop.permute.xlu0 %263
    %265 = vset.pattern.permute.xlu0 0
    %266 = vperm.xlu0 %265, %v253
    %v267 = vpop.permute.xlu0 %266
    %268 = vset.pattern.permute.xlu0 0
    %269 = vperm.xlu0 %268, %v254
    %v270 = vpop.permute.xlu0 %269
    %271 = vset.pattern.permute.xlu0 0
    %272 = vperm.xlu0 %271, %v255
    %v273 = vpop.permute.xlu0 %272
    %274 = vset.pattern.permute.xlu0 0
    %275 = vperm.xlu0 %274, %v256
    %v276 = vpop.permute.xlu0 %275
    %277 = vset.pattern.permute.xlu0 0
    %278 = vperm.xlu0 %277, %v257
    %v279 = vpop.permute.xlu0 %278
    %280 = vset.pattern.permute.xlu0 0
    %281 = vperm.xlu0 %280, %v258
    %v282 = vpop.permute.xlu0 %281
    %283 = vset.pattern.permute.xlu0 0
    %284 = vperm.xlu0 %283, %v259
    %v285 = vpop.permute.xlu0 %284
    %vm286 = vcmp.eq.s32.totalorder %v264, %v261
    %vm287 = vcmp.eq.s32.totalorder %v267, %v261
    %vm288 = vcmp.eq.s32.totalorder %v270, %v261
    %vm289 = vcmp.eq.s32.totalorder %v273, %v261
    %vm290 = vcmp.eq.s32.totalorder %v276, %v261
    %vm291 = vcmp.eq.s32.totalorder %v279, %v261
    %vm292 = vcmp.eq.s32.totalorder %v282, %v261
    %vm293 = vcmp.eq.s32.totalorder %v285, %v261
    %v294 = vsel %vm286, 1, 0
    %v295 = vsel %vm287, 1, 0
    %v296 = vsel %vm288, 1, 0
    %v297 = vsel %vm289, 1, 0
    %v298 = vsel %vm290, 1, 0
    %v299 = vsel %vm291, 1, 0
    %v300 = vsel %vm292, 1, 0
    %v301 = vsel %vm293, 1, 0
    %v302 = vcvt.s32.f32 %v294
    %v303 = vcvt.s32.f32 %v295
    %v304 = vcvt.s32.f32 %v296
    %v305 = vcvt.s32.f32 %v297
    %v306 = vcvt.s32.f32 %v298
    %v307 = vcvt.s32.f32 %v299
    %v308 = vcvt.s32.f32 %v300
    %v309 = vcvt.s32.f32 %v301
    %v310 = vlaneseq
    %v311 = vshrl.u32 %v310, 7
    %v312 = vadd.s32 %v311, 8
    %vm313 = vcmp.ne.s32.totalorder %v311, 0
    %vm314 = vcmp.ne.s32.totalorder %v312, 0
    %v315 = vsel %vm313, 1, 0
    %v316 = vsel %vm314, 1, 0
    %v317 = vcvt.s32.f32 %v315
    %v318 = vcvt.s32.f32 %v316
    %v319 = vld [vmem:[#allocation2] sm:$0xff]
    %v320 = vld [vmem:[#allocation2 + $0x8] sm:$0xff]
    %v321 = vld [vmem:[#allocation2 + $0x10] sm:$0xff]
    %v322 = vld [vmem:[#allocation2 + $0x18] sm:$0xff]
    %v323 = vld [vmem:[#allocation2 + $0x20] sm:$0xff]
    %v324 = vld [vmem:[#allocation2 + $0x28] sm:$0xff]
    %v325 = vld [vmem:[#allocation2 + $0x30] sm:$0xff]
    %v326 = vld [vmem:[#allocation2 + $0x38] sm:$0xff]
    %v327 = vld [vmem:[#allocation2 + $0x40] sm:$0xff]
    %v328 = vld [vmem:[#allocation2 + $0x48] sm:$0xff]
    %v329 = vld [vmem:[#allocation2 + $0x50] sm:$0xff]
    %v330 = vld [vmem:[#allocation2 + $0x58] sm:$0xff]
    %v331 = vld [vmem:[#allocation2 + $0x60] sm:$0xff]
    %v332 = vld [vmem:[#allocation2 + $0x68] sm:$0xff]
    %v333 = vld [vmem:[#allocation2 + $0x70] sm:$0xff]
    %v334 = vld [vmem:[#allocation2 + $0x78] sm:$0xff]
    %v335 = vld [vmem:[#allocation5] sm:$0xff]
    %v336 = vld [vmem:[#allocation5 + $0x8] sm:$0xff]
    %v337 = vld [vmem:[#allocation5 + $0x10] sm:$0xff]
    %v338 = vld [vmem:[#allocation5 + $0x18] sm:$0xff]
    %v339 = vld [vmem:[#allocation5 + $0x20] sm:$0xff]
    %v340 = vld [vmem:[#allocation5 + $0x28] sm:$0xff]
    %v341 = vld [vmem:[#allocation5 + $0x30] sm:$0xff]
    %v342 = vld [vmem:[#allocation5 + $0x38] sm:$0xff]
    %v343 = vld [vmem:[#allocation5 + $0x40] sm:$0xff]
    %v344 = vld [vmem:[#allocation5 + $0x48] sm:$0xff]
    %v345 = vld [vmem:[#allocation5 + $0x50] sm:$0xff]
    %v346 = vld [vmem:[#allocation5 + $0x58] sm:$0xff]
    %v347 = vld [vmem:[#allocation5 + $0x60] sm:$0xff]
    %v348 = vld [vmem:[#allocation5 + $0x68] sm:$0xff]
    %v349 = vld [vmem:[#allocation5 + $0x70] sm:$0xff]
    %v350 = vld [vmem:[#allocation5 + $0x78] sm:$0xff]
    %v351 = vld [vmem:[#allocation7] sm:$0xff]
    %v352 = vld [vmem:[#allocation7 + $0x8] sm:$0xff]
    %v353 = vld [vmem:[#allocation7 + $0x10] sm:$0xff]
    %v354 = vld [vmem:[#allocation7 + $0x18] sm:$0xff]
    %v355 = vld [vmem:[#allocation7 + $0x20] sm:$0xff]
    %v356 = vld [vmem:[#allocation7 + $0x28] sm:$0xff]
    %v357 = vld [vmem:[#allocation7 + $0x30] sm:$0xff]
    %v358 = vld [vmem:[#allocation7 + $0x38] sm:$0xff]
    %v359 = vld [vmem:[#allocation7 + $0x40] sm:$0xff]
    %v360 = vld [vmem:[#allocation7 + $0x48] sm:$0xff]
    %v361 = vld [vmem:[#allocation7 + $0x50] sm:$0xff]
    %v362 = vld [vmem:[#allocation7 + $0x58] sm:$0xff]
    %v363 = vld [vmem:[#allocation7 + $0x60] sm:$0xff]
    %v364 = vld [vmem:[#allocation7 + $0x68] sm:$0xff]
    %v365 = vld [vmem:[#allocation7 + $0x70] sm:$0xff]
    %v366 = vld [vmem:[#allocation7 + $0x78] sm:$0xff]
    loop: start=0, step=1, limit=3
    $region42: #{tpu_custom_call.1} parent=1 // loop_pre_header
      _
    $region43: #{tpu_custom_call.1} parent=1 // loop_header
      %s368 = sphi 0, %s372
      %p369 = scmp.ge.s32.totalorder %s368, 3
      %v373 = vphi 0.0, %v865
      %v374 = vphi 0.0, %v866
    $region44: #{tpu_custom_call.1} parent=1 // loop_header_branch
      %371 = sbr.rel (%p369) target = $region48
    $region45: #{tpu_custom_call.1} parent=1 // loop_body
      %v376 = vsel %vm93, %v302, 0
      %v379 = vsel %vm93, %v303, 0
      %v382 = vsel %vm93, %v304, 0
      %v385 = vsel %vm93, %v305, 0
      %v388 = vsel %vm93, %v306, 0
      %v391 = vsel %vm93, %v307, 0
      %v394 = vsel %vm93, %v308, 0
      %v397 = vsel %vm93, %v309, 0
      %399 = vmatprep.subr.mxu0 0.0
      %400 = vmatpush1.msra.mxu0 %v373
      %401 = vmatprep.subr.mxu0 0.0
      %402 = vmatpush1.msra.mxu0 %v374
      %403 = vmatprep.subr.mxu0 0.0
      %404 = vmatpush1.msra.mxu0 0.0
      %405 = vmatprep.subr.mxu0 0.0
      %406 = vmatpush1.msra.mxu0 0.0
      %407 = vmatprep.subr.mxu0 0.0
      %408 = vmatpush1.msra.mxu0 0.0
      %409 = vmatprep.subr.mxu0 0.0
      %410 = vmatpush1.msra.mxu0 0.0
      %411 = vmatprep.subr.mxu0 0.0
      %412 = vmatpush1.msra.mxu0 0.0
      %413 = vmatprep.subr.mxu0 0.0
      %414 = vmatpush1.msra.mxu0 0.0
      %415 = vmatprep.subr.mxu0 0.0
      %416 = vmatpush1.msra.mxu0 0.0
      %417 = vmatprep.subr.mxu0 0.0
      %418 = vmatpush1.msra.mxu0 0.0
      %419 = vmatprep.subr.mxu0 0.0
      %420 = vmatpush1.msra.mxu0 0.0
      %421 = vmatprep.subr.mxu0 0.0
      %422 = vmatpush1.msra.mxu0 0.0
      %423 = vmatprep.subr.mxu0 0.0
      %424 = vmatpush1.msra.mxu0 0.0
      %425 = vmatprep.subr.mxu0 0.0
      %426 = vmatpush1.msra.mxu0 0.0
      %427 = vmatprep.subr.mxu0 0.0
      %428 = vmatpush1.msra.mxu0 0.0
      %429 = vmatprep.subr.mxu0 0.0
      %430 = vmatpush1.msra.mxu0 0.0
      %431 = vmatprep.subr.mxu0 0.0
      %432 = vmatpush1.msra.mxu0 0.0
      %433 = vmatprep.subr.mxu0 0.0
      %434 = vmatpush1.msra.mxu0 0.0
      %435 = vmatprep.subr.mxu0 0.0
      %436 = vmatpush1.msra.mxu0 0.0
      %437 = vmatprep.subr.mxu0 0.0
      %438 = vmatpush1.msra.mxu0 0.0
      %439 = vmatprep.subr.mxu0 0.0
      %440 = vmatpush1.msra.mxu0 0.0
      %441 = vmatprep.subr.mxu0 0.0
      %442 = vmatpush1.msra.mxu0 0.0
      %443 = vmatprep.subr.mxu0 0.0
      %444 = vmatpush1.msra.mxu0 0.0
      %445 = vmatprep.subr.mxu0 0.0
      %446 = vmatpush1.msra.mxu0 0.0
      %447 = vmatprep.subr.mxu0 0.0
      %448 = vmatpush1.msra.mxu0 0.0
      %449 = vmatprep.subr.mxu0 0.0
      %450 = vmatpush1.msra.mxu0 0.0
      %451 = vmatprep.subr.mxu0 0.0
      %452 = vmatpush1.msra.mxu0 0.0
      %453 = vmatprep.subr.mxu0 0.0
      %454 = vmatpush1.msra.mxu0 0.0
      %455 = vmatprep.subr.mxu0 0.0
      %456 = vmatpush1.msra.mxu0 0.0
      %457 = vmatprep.subr.mxu0 0.0
      %458 = vmatpush1.msra.mxu0 0.0
      %459 = vmatprep.subr.mxu0 0.0
      %460 = vmatpush1.msra.mxu0 0.0
      %461 = vmatprep.subr.mxu0 0.0
      %462 = vmatpush1.msra.mxu0 0.0
      %463 = vmatprep.mubr.f32.mxu0 0.0
      %464 = vmatmul.mubr.f32.gmra.mrb[0].mxu0 %v376
      %v465 = vpop.f32.mrb[0].mxu0
      %v466 = vadd.f32 0.0, %v465
      %v467 = vpop.f32.mrb[0].mxu0
      %468 = vmatprep.mubr.f32.mxu0 0.0
      %469 = vmatmul.mubr.f32.gmra.mrb[0].mxu0 %v379
      %v470 = vpop.f32.mrb[0].mxu0
      %v471 = vadd.f32 0.0, %v470
      %v472 = vpop.f32.mrb[0].mxu0
      %473 = vmatprep.mubr.f32.mxu0 0.0
      %474 = vmatmul.mubr.f32.gmra.mrb[0].mxu0 %v382
      %v475 = vpop.f32.mrb[0].mxu0
      %v476 = vadd.f32 0.0, %v475
      %v477 = vpop.f32.mrb[0].mxu0
      %478 = vmatprep.mubr.f32.mxu0 0.0
      %479 = vmatmul.mubr.f32.gmra.mrb[0].mxu0 %v385
      %v480 = vpop.f32.mrb[0].mxu0
      %v481 = vadd.f32 0.0, %v480
      %v482 = vpop.f32.mrb[0].mxu0
      %483 = vmatprep.mubr.f32.mxu0 0.0
      %484 = vmatmul.mubr.f32.gmra.mrb[0].mxu0 %v388
      %v485 = vpop.f32.mrb[0].mxu0
      %v486 = vadd.f32 0.0, %v485
      %v487 = vpop.f32.mrb[0].mxu0
      %488 = vmatprep.mubr.f32.mxu0 0.0
      %489 = vmatmul.mubr.f32.gmra.mrb[0].mxu0 %v391
      %v490 = vpop.f32.mrb[0].mxu0
      %v491 = vadd.f32 0.0, %v490
      %v492 = vpop.f32.mrb[0].mxu0
      %493 = vmatprep.mubr.f32.mxu0 0.0
      %494 = vmatmul.mubr.f32.gmra.mrb[0].mxu0 %v394
      %v495 = vpop.f32.mrb[0].mxu0
      %v496 = vadd.f32 0.0, %v495
      %v497 = vpop.f32.mrb[0].mxu0
      %498 = vmatprep.mubr.f32.mxu0 0.0
      %499 = vmatmul.mubr.f32.gmra.mrb[0].mxu0 %v397
      %v500 = vpop.f32.mrb[0].mxu0
      %v501 = vadd.f32 0.0, %v500
      %v502 = vpop.f32.mrb[0].mxu0
      %503 = vdwg.mxu0
      %504 = vmatprep.subr.mxu0 0.0
      %505 = vmatpush1.msra.mxu0 %v335
      %506 = vmatprep.subr.mxu0 0.0
      %507 = vmatpush1.msra.mxu0 %v336
      %508 = vmatprep.subr.mxu0 0.0
      %509 = vmatpush1.msra.mxu0 %v337
      %510 = vmatprep.subr.mxu0 0.0
      %511 = vmatpush1.msra.mxu0 %v338
      %512 = vmatprep.subr.mxu0 0.0
      %513 = vmatpush1.msra.mxu0 %v339
      %514 = vmatprep.subr.mxu0 0.0
      %515 = vmatpush1.msra.mxu0 %v340
      %516 = vmatprep.subr.mxu0 0.0
      %517 = vmatpush1.msra.mxu0 %v341
      %518 = vmatprep.subr.mxu0 0.0
      %519 = vmatpush1.msra.mxu0 %v342
      %520 = vmatprep.subr.mxu0 0.0
      %521 = vmatpush1.msra.mxu0 %v343
      %522 = vmatprep.subr.mxu0 0.0
      %523 = vmatpush1.msra.mxu0 %v344
      %524 = vmatprep.subr.mxu0 0.0
      %525 = vmatpush1.msra.mxu0 %v345
      %526 = vmatprep.subr.mxu0 0.0
      %527 = vmatpush1.msra.mxu0 %v346
      %528 = vmatprep.subr.mxu0 0.0
      %529 = vmatpush1.msra.mxu0 %v347
      %530 = vmatprep.subr.mxu0 0.0
      %531 = vmatpush1.msra.mxu0 %v348
      %532 = vmatprep.subr.mxu0 0.0
      %533 = vmatpush1.msra.mxu0 %v349
      %534 = vmatprep.subr.mxu0 0.0
      %535 = vmatpush1.msra.mxu0 %v350
      %536 = vmatprep.subr.mxu0 0.0
      %537 = vmatpush1.msra.mxu0 0.0
      %538 = vmatprep.subr.mxu0 0.0
      %539 = vmatpush1.msra.mxu0 0.0
      %540 = vmatprep.subr.mxu0 0.0
      %541 = vmatpush1.msra.mxu0 0.0
      %542 = vmatprep.subr.mxu0 0.0
      %543 = vmatpush1.msra.mxu0 0.0
      %544 = vmatprep.subr.mxu0 0.0
      %545 = vmatpush1.msra.mxu0 0.0
      %546 = vmatprep.subr.mxu0 0.0
      %547 = vmatpush1.msra.mxu0 0.0
      %548 = vmatprep.subr.mxu0 0.0
      %549 = vmatpush1.msra.mxu0 0.0
      %550 = vmatprep.subr.mxu0 0.0
      %551 = vmatpush1.msra.mxu0 0.0
      %552 = vmatprep.subr.mxu0 0.0
      %553 = vmatpush1.msra.mxu0 0.0
      %554 = vmatprep.subr.mxu0 0.0
      %555 = vmatpush1.msra.mxu0 0.0
      %556 = vmatprep.subr.mxu0 0.0
      %557 = vmatpush1.msra.mxu0 0.0
      %558 = vmatprep.subr.mxu0 0.0
      %559 = vmatpush1.msra.mxu0 0.0
      %560 = vmatprep.subr.mxu0 0.0
      %561 = vmatpush1.msra.mxu0 0.0
      %562 = vmatprep.subr.mxu0 0.0
      %563 = vmatpush1.msra.mxu0 0.0
      %564 = vmatprep.subr.mxu0 0.0
      %565 = vmatpush1.msra.mxu0 0.0
      %566 = vmatprep.subr.mxu0 0.0
      %567 = vmatpush1.msra.mxu0 0.0
      %568 = vmatprep.mubr.f32.mxu0 0.0
      %569 = vmatmul.mubr.f32.gmra.mrb[0].mxu0 %v466
      %v570 = vpop.f32.mrb[0].mxu0
      %v571 = vadd.f32 0.0, %v570
      %v572 = vpop.f32.mrb[0].mxu0
      %573 = vmatprep.mubr.f32.mxu0 0.0
      %574 = vmatmul.mubr.f32.gmra.mrb[0].mxu0 %v471
      %v575 = vpop.f32.mrb[0].mxu0
      %v576 = vadd.f32 0.0, %v575
      %v577 = vpop.f32.mrb[0].mxu0
      %578 = vmatprep.mubr.f32.mxu0 0.0
      %579 = vmatmul.mubr.f32.gmra.mrb[0].mxu0 %v476
      %v580 = vpop.f32.mrb[0].mxu0
      %v581 = vadd.f32 0.0, %v580
      %v582 = vpop.f32.mrb[0].mxu0
      %583 = vmatprep.mubr.f32.mxu0 0.0
      %584 = vmatmul.mubr.f32.gmra.mrb[0].mxu0 %v481
      %v585 = vpop.f32.mrb[0].mxu0
      %v586 = vadd.f32 0.0, %v585
      %v587 = vpop.f32.mrb[0].mxu0
      %588 = vmatprep.mubr.f32.mxu0 0.0
      %589 = vmatmul.mubr.f32.gmra.mrb[0].mxu0 %v486
      %v590 = vpop.f32.mrb[0].mxu0
      %v591 = vadd.f32 0.0, %v590
      %v592 = vpop.f32.mrb[0].mxu0
      %593 = vmatprep.mubr.f32.mxu0 0.0
      %594 = vmatmul.mubr.f32.gmra.mrb[0].mxu0 %v491
      %v595 = vpop.f32.mrb[0].mxu0
      %v596 = vadd.f32 0.0, %v595
      %v597 = vpop.f32.mrb[0].mxu0
      %598 = vmatprep.mubr.f32.mxu0 0.0
      %599 = vmatmul.mubr.f32.gmra.mrb[0].mxu0 %v496
      %v600 = vpop.f32.mrb[0].mxu0
      %v601 = vadd.f32 0.0, %v600
      %v602 = vpop.f32.mrb[0].mxu0
      %603 = vmatprep.mubr.f32.mxu0 0.0
      %604 = vmatmul.mubr.f32.gmra.mrb[0].mxu0 %v501
      %v605 = vpop.f32.mrb[0].mxu0
      %v606 = vadd.f32 0.0, %v605
      %v607 = vpop.f32.mrb[0].mxu0
      %608 = vdwg.mxu0
      %v609 = vadd.f32 %v169, %v571
      %v610 = vadd.f32 %v175, %v576
      %v611 = vxor.u32 %v609, 2147483648
      %v612 = vxor.u32 %v610, 2147483648
      %v613 = vmul.f32 %v611, 1.442695
      %v614 = vpow.pop %v613
      %v615 = vmul.f32 %v612, 1.442695
      %v616 = vpow.pop %v615
      %v617 = vadd.f32 %v614, 1.0
      %v618 = vadd.f32 %v616, 1.0
      %v619 = vrcp.pop %v617
      %v620 = vmul.f32 1.0, %v619
      %v621 = vrcp.pop %v618
      %v622 = vmul.f32 1.0, %v621
      %v623 = vadd.f32 %v466, 0.0
      %v624 = vadd.f32 %v471, 0.0
      %v625 = vmul.f32 %v620, %v466
      %v626 = vmul.f32 %v622, %v471
      %v627 = vadd.f32 %v625, 0.0
      %v628 = vadd.f32 %v626, 0.0
      %v629 = vadd.f32 %v169, %v581
      %v630 = vadd.f32 %v175, %v586
      %v631 = vxor.u32 %v629, 2147483648
      %v632 = vxor.u32 %v630, 2147483648
      %v633 = vmul.f32 %v631, 1.442695
      %v634 = vpow.pop %v633
      %v635 = vmul.f32 %v632, 1.442695
      %v636 = vpow.pop %v635
      %v637 = vadd.f32 %v634, 1.0
      %v638 = vadd.f32 %v636, 1.0
      %v639 = vrcp.pop %v637
      %v640 = vmul.f32 1.0, %v639
      %v641 = vrcp.pop %v638
      %v642 = vmul.f32 1.0, %v641
      %v643 = vadd.f32 %v623, %v476
      %v644 = vadd.f32 %v624, %v481
      %v645 = vmul.f32 %v640, %v476
      %v646 = vmul.f32 %v642, %v481
      %v647 = vadd.f32 %v627, %v645
      %v648 = vadd.f32 %v628, %v646
      %v649 = vadd.f32 %v169, %v591
      %v650 = vadd.f32 %v175, %v596
      %v651 = vxor.u32 %v649, 2147483648
      %v652 = vxor.u32 %v650, 2147483648
      %v653 = vmul.f32 %v651, 1.442695
      %v654 = vpow.pop %v653
      %v655 = vmul.f32 %v652, 1.442695
      %v656 = vpow.pop %v655
      %v657 = vadd.f32 %v654, 1.0
      %v658 = vadd.f32 %v656, 1.0
      %v659 = vrcp.pop %v657
      %v660 = vmul.f32 1.0, %v659
      %v661 = vrcp.pop %v658
      %v662 = vmul.f32 1.0, %v661
      %v663 = vadd.f32 %v643, %v486
      %v664 = vadd.f32 %v644, %v491
      %v665 = vmul.f32 %v660, %v486
      %v666 = vmul.f32 %v662, %v491
      %v667 = vadd.f32 %v647, %v665
      %v668 = vadd.f32 %v648, %v666
      %v669 = vadd.f32 %v169, %v601
      %v670 = vadd.f32 %v175, %v606
      %v671 = vxor.u32 %v669, 2147483648
      %v672 = vxor.u32 %v670, 2147483648
      %v673 = vmul.f32 %v671, 1.442695
      %v674 = vpow.pop %v673
      %v675 = vmul.f32 %v672, 1.442695
      %v676 = vpow.pop %v675
      %v677 = vadd.f32 %v674, 1.0
      %v678 = vadd.f32 %v676, 1.0
      %v679 = vrcp.pop %v677
      %v680 = vmul.f32 1.0, %v679
      %v681 = vrcp.pop %v678
      %v682 = vmul.f32 1.0, %v681
      %v683 = vadd.f32 %v663, %v496
      %v684 = vadd.f32 %v664, %v501
      %v685 = vmul.f32 %v680, %v496
      %v686 = vmul.f32 %v682, %v501
      %v687 = vadd.f32 %v667, %v685
      %v688 = vadd.f32 %v668, %v686
      %689 = vmatprep.subr.mxu0 0.0
      %690 = vmatpush1.msra.mxu0 %v319
      %691 = vmatprep.subr.mxu0 0.0
      %692 = vmatpush1.msra.mxu0 %v320
      %693 = vmatprep.subr.mxu0 0.0
      %694 = vmatpush1.msra.mxu0 %v321
      %695 = vmatprep.subr.mxu0 0.0
      %696 = vmatpush1.msra.mxu0 %v322
      %697 = vmatprep.subr.mxu0 0.0
      %698 = vmatpush1.msra.mxu0 %v323
      %699 = vmatprep.subr.mxu0 0.0
      %700 = vmatpush1.msra.mxu0 %v324
      %701 = vmatprep.subr.mxu0 0.0
      %702 = vmatpush1.msra.mxu0 %v325
      %703 = vmatprep.subr.mxu0 0.0
      %704 = vmatpush1.msra.mxu0 %v326
      %705 = vmatprep.subr.mxu0 0.0
      %706 = vmatpush1.msra.mxu0 %v327
      %707 = vmatprep.subr.mxu0 0.0
      %708 = vmatpush1.msra.mxu0 %v328
      %709 = vmatprep.subr.mxu0 0.0
      %710 = vmatpush1.msra.mxu0 %v329
      %711 = vmatprep.subr.mxu0 0.0
      %712 = vmatpush1.msra.mxu0 %v330
      %713 = vmatprep.subr.mxu0 0.0
      %714 = vmatpush1.msra.mxu0 %v331
      %715 = vmatprep.subr.mxu0 0.0
      %716 = vmatpush1.msra.mxu0 %v332
      %717 = vmatprep.subr.mxu0 0.0
      %718 = vmatpush1.msra.mxu0 %v333
      %719 = vmatprep.subr.mxu0 0.0
      %720 = vmatpush1.msra.mxu0 %v334
      %721 = vmatprep.subr.mxu0 0.0
      %722 = vmatpush1.msra.mxu0 0.0
      %723 = vmatprep.subr.mxu0 0.0
      %724 = vmatpush1.msra.mxu0 0.0
      %725 = vmatprep.subr.mxu0 0.0
      %726 = vmatpush1.msra.mxu0 0.0
      %727 = vmatprep.subr.mxu0 0.0
      %728 = vmatpush1.msra.mxu0 0.0
      %729 = vmatprep.subr.mxu0 0.0
      %730 = vmatpush1.msra.mxu0 0.0
      %731 = vmatprep.subr.mxu0 0.0
      %732 = vmatpush1.msra.mxu0 0.0
      %733 = vmatprep.subr.mxu0 0.0
      %734 = vmatpush1.msra.mxu0 0.0
      %735 = vmatprep.subr.mxu0 0.0
      %736 = vmatpush1.msra.mxu0 0.0
      %737 = vmatprep.subr.mxu0 0.0
      %738 = vmatpush1.msra.mxu0 0.0
      %739 = vmatprep.subr.mxu0 0.0
      %740 = vmatpush1.msra.mxu0 0.0
      %741 = vmatprep.subr.mxu0 0.0
      %742 = vmatpush1.msra.mxu0 0.0
      %743 = vmatprep.subr.mxu0 0.0
      %744 = vmatpush1.msra.mxu0 0.0
      %745 = vmatprep.subr.mxu0 0.0
      %746 = vmatpush1.msra.mxu0 0.0
      %747 = vmatprep.subr.mxu0 0.0
      %748 = vmatpush1.msra.mxu0 0.0
      %749 = vmatprep.subr.mxu0 0.0
      %750 = vmatpush1.msra.mxu0 0.0
      %751 = vmatprep.subr.mxu0 0.0
      %752 = vmatpush1.msra.mxu0 0.0
      %753 = vmatprep.mubr.f32.mxu0 0.0
      %754 = vmatmul.mubr.f32.gmra.mrb[0].mxu0 %v683
      %v755 = vpop.f32.mrb[0].mxu0
      %v756 = vadd.f32 0.0, %v755
      %v757 = vpop.f32.mrb[0].mxu0
      %758 = vmatprep.mubr.f32.mxu0 0.0
      %759 = vmatmul.mubr.f32.gmra.mrb[0].mxu0 %v684
      %v760 = vpop.f32.mrb[0].mxu0
      %v761 = vadd.f32 0.0, %v760
      %v762 = vpop.f32.mrb[0].mxu0
      %763 = vdwg.mxu0
      %v764 = vadd.f32 %v167, %v756
      %v765 = vadd.f32 %v173, %v761
      %v766 = vxor.u32 %v764, 2147483648
      %v767 = vxor.u32 %v765, 2147483648
      %v768 = vmul.f32 %v766, 1.442695
      %v769 = vpow.pop %v768
      %v770 = vmul.f32 %v767, 1.442695
      %v771 = vpow.pop %v770
      %v772 = vadd.f32 %v769, 1.0
      %v773 = vadd.f32 %v771, 1.0
      %v774 = vrcp.pop %v772
      %v775 = vmul.f32 1.0, %v774
      %v776 = vrcp.pop %v773
      %v777 = vmul.f32 1.0, %v776
      %778 = vmatprep.subr.mxu0 0.0
      %779 = vmatpush1.msra.mxu0 %v351
      %780 = vmatprep.subr.mxu0 0.0
      %781 = vmatpush1.msra.mxu0 %v352
      %782 = vmatprep.subr.mxu0 0.0
      %783 = vmatpush1.msra.mxu0 %v353
      %784 = vmatprep.subr.mxu0 0.0
      %785 = vmatpush1.msra.mxu0 %v354
      %786 = vmatprep.subr.mxu0 0.0
      %787 = vmatpush1.msra.mxu0 %v355
      %788 = vmatprep.subr.mxu0 0.0
      %789 = vmatpush1.msra.mxu0 %v356
      %790 = vmatprep.subr.mxu0 0.0
      %791 = vmatpush1.msra.mxu0 %v357
      %792 = vmatprep.subr.mxu0 0.0
      %793 = vmatpush1.msra.mxu0 %v358
      %794 = vmatprep.subr.mxu0 0.0
      %795 = vmatpush1.msra.mxu0 %v359
      %796 = vmatprep.subr.mxu0 0.0
      %797 = vmatpush1.msra.mxu0 %v360
      %798 = vmatprep.subr.mxu0 0.0
      %799 = vmatpush1.msra.mxu0 %v361
      %800 = vmatprep.subr.mxu0 0.0
      %801 = vmatpush1.msra.mxu0 %v362
      %802 = vmatprep.subr.mxu0 0.0
      %803 = vmatpush1.msra.mxu0 %v363
      %804 = vmatprep.subr.mxu0 0.0
      %805 = vmatpush1.msra.mxu0 %v364
      %806 = vmatprep.subr.mxu0 0.0
      %807 = vmatpush1.msra.mxu0 %v365
      %808 = vmatprep.subr.mxu0 0.0
      %809 = vmatpush1.msra.mxu0 %v366
      %810 = vmatprep.subr.mxu0 0.0
      %811 = vmatpush1.msra.mxu0 0.0
      %812 = vmatprep.subr.mxu0 0.0
      %813 = vmatpush1.msra.mxu0 0.0
      %814 = vmatprep.subr.mxu0 0.0
      %815 = vmatpush1.msra.mxu0 0.0
      %816 = vmatprep.subr.mxu0 0.0
      %817 = vmatpush1.msra.mxu0 0.0
      %818 = vmatprep.subr.mxu0 0.0
      %819 = vmatpush1.msra.mxu0 0.0
      %820 = vmatprep.subr.mxu0 0.0
      %821 = vmatpush1.msra.mxu0 0.0
      %822 = vmatprep.subr.mxu0 0.0
      %823 = vmatpush1.msra.mxu0 0.0
      %824 = vmatprep.subr.mxu0 0.0
      %825 = vmatpush1.msra.mxu0 0.0
      %826 = vmatprep.subr.mxu0 0.0
      %827 = vmatpush1.msra.mxu0 0.0
      %828 = vmatprep.subr.mxu0 0.0
      %829 = vmatpush1.msra.mxu0 0.0
      %830 = vmatprep.subr.mxu0 0.0
      %831 = vmatpush1.msra.mxu0 0.0
      %832 = vmatprep.subr.mxu0 0.0
      %833 = vmatpush1.msra.mxu0 0.0
      %834 = vmatprep.subr.mxu0 0.0
      %835 = vmatpush1.msra.mxu0 0.0
      %836 = vmatprep.subr.mxu0 0.0
      %837 = vmatpush1.msra.mxu0 0.0
      %838 = vmatprep.subr.mxu0 0.0
      %839 = vmatpush1.msra.mxu0 0.0
      %840 = vmatprep.subr.mxu0 0.0
      %841 = vmatpush1.msra.mxu0 0.0
      %842 = vmatprep.mubr.f32.mxu0 0.0
      %843 = vmatmul.mubr.f32.gmra.mrb[0].mxu0 %v687
      %v844 = vpop.f32.mrb[0].mxu0
      %v845 = vadd.f32 0.0, %v844
      %v846 = vpop.f32.mrb[0].mxu0
      %847 = vmatprep.mubr.f32.mxu0 0.0
      %848 = vmatmul.mubr.f32.gmra.mrb[0].mxu0 %v688
      %v849 = vpop.f32.mrb[0].mxu0
      %v850 = vadd.f32 0.0, %v849
      %v851 = vpop.f32.mrb[0].mxu0
      %852 = vdwg.mxu0
      %v853 = vadd.f32 %v244, %v845
      %v854 = vadd.f32 %v249, %v850
      %v855 = vtanh.pop %v853
      %v856 = vtanh.pop %v854
      %v857 = vsub.f32 1.0, %v775
      %v858 = vsub.f32 1.0, %v777
      %v859 = vmul.f32 %v857, %v683
      %v860 = vmul.f32 %v858, %v684
      %v861 = vmul.f32 %v775, %v855
      %v862 = vmul.f32 %v777, %v856
      %v863 = vadd.f32 %v859, %v861
      %v864 = vadd.f32 %v860, %v862
      %v865 = vmul.f32 %v863, %v317
      %v866 = vmul.f32 %v864, %v318
    $region46: #{tpu_custom_call.1} parent=1 // loop_footer
      %s372 = sadd.s32 1, %s368
    $region47: #{tpu_custom_call.1} parent=1 // loop_footer_branch
      %367 = sbr.rel target = $region43
    $region48: #{tpu_custom_call.1} parent=1 // loop_exit
      _
    %867 = vst [vmem:[#allocation8] sm:$0xff] %v373
    %868 = vst [vmem:[#allocation8 + $0x8] sm:$0xff] %v374
    // Predicated region
    $region49: #{tpu_custom_call.1} parent=1 // pred_check
      _
    $region50: #{tpu_custom_call.1} parent=1 // pred_check_branch
      %870 = sbr.rel (0) target = $region52
    $region51: #{tpu_custom_call.1} parent=1 // pred_region
      %s872 = ssub.s32 256, 256
      %873 = vsyncadd [#allocation4], %s872
      %s874 = sshll.u32 [#allocation8], 4
      %s875 = int_to_ptr.vmem [resolvable:$true] %s874
      %880 = dma.vmem_to_hbm [thread:$0]  %s875, 256, %s7, [#allocation4], 128, 128, 8
    $region52: #{tpu_custom_call.1} parent=1 // pred_fallthru
      _
    // Predicated region
    $region53: #{tpu_custom_call.1} parent=1 // pred_check
      _
    $region54: #{tpu_custom_call.1} parent=1 // pred_check_branch
      %882 = sbr.rel (0) target = $region56
    $region55: #{tpu_custom_call.1} parent=1 // pred_region
      %883 = dma.done [#allocation4], 256
    $region56: #{tpu_custom_call.1} parent=1 // pred_fallthru
      _
    %884 = vsyncpa [#allocation3], 1
    %885 = vsyncpa [#allocation6], 1
    %886 = vsyncpa [#allocation4], 1

</llo_original>
